<compile_context>
chip_gen: v5e
topology: v5e:2x2
jax: 0.10.0
libtpu: 0.0.40
codegen_flags: <defaults>
</compile_context>

<pallas_src>
import functools

import numpy as np
import jax
import jax.numpy as jnp
from jax.experimental import pallas as pl
from jax.experimental.pallas import tpu as pltpu


# ---------------------------------------------------------------------------
# Pallas kernel: one (C, t_hw) slab = one batch element x one lane-dense spatial tile.
# ---------------------------------------------------------------------------
def attention_dropout_kernel(x_ref, o_ref, *, threshold, randnum, inv_c):
    x = x_ref[...]                                                # (C, T)
    # Channel-wise mean accumulated in f32 (exact for f32, safe for bf16 inputs).
    cmap = jnp.sum(x.astype(jnp.float32), axis=0, keepdims=True) * inv_c   # (1, T)
    drop_mask = jnp.where(cmap > threshold, 0.0, 1.0)             # (1, T)
    importance = jax.nn.sigmoid(cmap)                             # exp on EUP
    selection = (1.0 - randnum) * importance + randnum * drop_mask
    # Cast selection to the I/O dtype before the broadcast multiply (halves VPU
    # bytes for bf16 I/O; a no-op for f32).
    o_ref[...] = (x * selection.astype(x.dtype)).astype(o_ref.dtype)


# ---------------------------------------------------------------------------
# Tiling policy helpers.
# ---------------------------------------------------------------------------
def _round_up(n, m):
    return ((n + m - 1) // m) * m


def _choose_tile(hw_pad, bytes_per_column, batch, per_block_budget):
    """Largest multiple-of-128 divisor of hw_pad whose block fits the VMEM budget,
    preferring tiles that give the grid >= 2 total steps (megacore sharding)."""
    n128 = hw_pad // 128
    cands = sorted({128 * d for d in range(1, n128 + 1) if n128 % d == 0},
                   reverse=True)
    fitting = [t for t in cands if t * bytes_per_column <= per_block_budget]
    if not fitting:
        fitting = [128]
    t_hw = fitting[0]
    if batch * (hw_pad // t_hw) < 2:          # keep both v7x TensorCores busy
        for t in fitting:
            if batch * (hw_pad // t) >= 2:
                t_hw = t
                break
    return t_hw


# ---------------------------------------------------------------------------
# Wrapper: flatten + pad spatial dims (stay NCHW), grid over (batch, spatial tiles).
# ---------------------------------------------------------------------------
def attention_dropout_forward(x_nchw, threshold, randnum):
    B, C, H, W = x_nchw.shape
    HW = H * W
    HW_pad = _round_up(HW, 128)               # lane-dense last dim -> unmasked vst
    x = x_nchw.reshape(B, C, HW)              # no transpose; spatial -> lanes
    if HW_pad != HW:
        # Padded columns see zero inputs -> zero outputs, and are sliced off below.
        x = jnp.pad(x, ((0, 0), (0, 0), (0, HW_pad - HW)))

    itemsize = x.dtype.itemsize
    sublane_pack = {4: 8, 2: 16, 1: 32}.get(itemsize, 8)
    c_pad = _round_up(C, sublane_pack)        # VMEM sublane padding of the C axis

    # VMEM budget for the 4 pipelined data buffers (2x input + 2x output double
    # buffers): 24 MiB fits v5e/v6e/v7x with headroom under a 32 MiB scoped limit.
    buffers_budget = 24 * 1024 * 1024
    per_block_budget = buffers_budget // 4
    t_hw = _choose_tile(HW_pad, c_pad * itemsize, B, per_block_budget)

    kernel = functools.partial(
        attention_dropout_kernel,
        threshold=float(threshold),
        randnum=float(randnum),
        inv_c=1.0 / C,
    )

    grid_spec = pltpu.PrefetchScalarGridSpec(
        num_scalar_prefetch=0,
        grid=(B, HW_pad // t_hw),
        in_specs=[pl.BlockSpec((None, C, t_hw), lambda b, s: (b, 0, s))],
        out_specs=pl.BlockSpec((None, C, t_hw), lambda b, s: (b, 0, s)),
    )

    cost = pl.CostEstimate(
        flops=int(5 * B * C * HW_pad),                     # mean + blend + multiply
        transcendentals=int(B * HW_pad),                   # one sigmoid per column
        bytes_accessed=int(2 * B * C * HW_pad * itemsize), # read + write the tensor
    )

    out = pl.pallas_call(
        kernel,
        out_shape=jax.ShapeDtypeStruct((B, C, HW_pad), x.dtype),
        grid_spec=grid_spec,
        compiler_params=pltpu.CompilerParams(
            dimension_semantics=("parallel", "parallel"),
            vmem_limit_bytes=32 * 1024 * 1024,
        ),
        cost_estimate=cost,
    )(x)

    if HW_pad != HW:
        out = out[:, :, :HW]
    return out.reshape(B, C, H, W)


# ---------------------------------------------------------------------------
# Pure-JAX reference (mirrors the PyTorch forward) for validation.
# ---------------------------------------------------------------------------
def ref_forward(x, threshold, randnum):
    cmap = jnp.mean(x, axis=1, keepdims=True)              # (B, 1, H, W)
    drop_mask = jnp.where(cmap > threshold, 0.0, 1.0)
    importance = jax.nn.sigmoid(cmap)
    selection = (1.0 - randnum) * importance + randnum * drop_mask
    return x * selection


if __name__ == "__main__":
    B, C, H, W = 2, 4, 16, 16
    threshold = 0.8

    key = jax.random.PRNGKey(0)
    kx, kr = jax.random.split(key)
    x = jax.random.normal(kx, (B, C, H, W), jnp.float32)    # NCHW, like PyTorch
    # randnum = random.uniform(threshold, 1 + threshold), fixed at module init.
    randnum = float(jax.random.uniform(kr, (), jnp.float32, threshold, 1.0 + threshold))

    out = jax.block_until_ready(attention_dropout_forward(x, threshold, randnum))
    ref = jax.block_until_ready(ref_forward(x, threshold, randnum))

    assert out.shape == (B, C, H, W), out.shape
    max_err = float(jnp.max(jnp.abs(out - ref)))
    if not np.allclose(np.asarray(out), np.asarray(ref), atol=1e-5, rtol=1e-5):
        raise AssertionError(f"kernel/reference mismatch, max abs err={max_err}")
    print("KERNEL_OK")
</pallas_src>

<mosaic_0001>
module attributes {stable_mosaic.version = 11 : i64} {
  func.func @attention_dropout_kernel(%arg0: i32, %arg1: i32, %arg2: memref<1x4x256xf32, #tpu.memory_space<vmem>>, %arg3: memref<1x4x256xf32, #tpu.memory_space<vmem>>) attributes {dimension_semantics = [#tpu.dimension_semantics<parallel>, #tpu.dimension_semantics<parallel>], iteration_bounds = array<i64: 2, 1>, scalar_prefetch = 0 : i64, scratch_operands = 0 : i64, tpu.core_type = #tpu.core_type<tc>, window_params = [{transform_indices = @transform_0, window_bounds = array<i64: 1, 4, 256>}, {transform_indices = @transform_1, window_bounds = array<i64: 1, 4, 256>}]} {
    %c0 = arith.constant 0 : index
    %c0_0 = arith.constant 0 : index
    %c0_1 = arith.constant 0 : index
    %0 = vector.load %arg2[%c0, %c0_0, %c0_1] : memref<1x4x256xf32, #tpu.memory_space<vmem>>, vector<1x4x256xf32>
    %1 = vector.shape_cast %0 : vector<1x4x256xf32> to vector<4x256xf32>
    %cst = arith.constant dense<0.000000e+00> : vector<256xf32>
    %2 = vector.multi_reduction <add>, %1, %cst [0] : vector<4x256xf32> to vector<256xf32>
    %3 = vector.shape_cast %2 : vector<256xf32> to vector<1x256xf32>
    %cst_2 = arith.constant 2.500000e-01 : f32
    %4 = vector.broadcast %cst_2 : f32 to vector<1x256xf32>
    %5 = arith.mulf %3, %4 : vector<1x256xf32>
    %cst_3 = arith.constant 8.000000e-01 : f32
    %6 = vector.broadcast %cst_3 : f32 to vector<1x256xf32>
    %7 = arith.cmpf ogt, %5, %6 : vector<1x256xf32>
    %cst_4 = arith.constant 0.000000e+00 : f32
    %cst_5 = arith.constant 1.000000e+00 : f32
    %8 = vector.broadcast %cst_4 : f32 to vector<1x256xf32>
    %9 = vector.broadcast %cst_5 : f32 to vector<1x256xf32>
    %10 = arith.select %7, %8, %9 : vector<1x256xi1>, vector<1x256xf32>
    %11 = arith.negf %5 : vector<1x256xf32>
    %12 = math.exp %11 : vector<1x256xf32>
    %cst_6 = arith.constant 1.000000e+00 : f32
    %13 = vector.broadcast %cst_6 : f32 to vector<1x256xf32>
    %14 = arith.addf %13, %12 : vector<1x256xf32>
    %15 = arith.divf %13, %14 : vector<1x256xf32>
    %cst_7 = arith.constant 0.192706168 : f32
    %16 = vector.broadcast %cst_7 : f32 to vector<1x256xf32>
    %17 = arith.mulf %16, %15 : vector<1x256xf32>
    %cst_8 = arith.constant 0.807293832 : f32
    %18 = vector.broadcast %cst_8 : f32 to vector<1x256xf32>
    %19 = arith.mulf %18, %10 : vector<1x256xf32>
    %20 = arith.addf %17, %19 : vector<1x256xf32>
    %21 = vector.broadcast %20 : vector<1x256xf32> to vector<4x256xf32>
    %22 = arith.mulf %1, %21 : vector<4x256xf32>
    %c0_9 = arith.constant 0 : index
    %c0_10 = arith.constant 0 : index
    %c0_11 = arith.constant 0 : index
    %23 = vector.load %arg3[%c0_9, %c0_10, %c0_11] : memref<1x4x256xf32, #tpu.memory_space<vmem>>, vector<1x4x256xf32>
    %24 = vector.shape_cast %23 : vector<1x4x256xf32> to vector<4x256xf32>
    %25 = vector.shape_cast %22 : vector<4x256xf32> to vector<1x4x256xf32>
    tpu.vector_store %arg3[%c0_9, %c0_10, %c0_11], %25 {strides = array<i32>} : memref<1x4x256xf32, #tpu.memory_space<vmem>>, vector<1x4x256xf32>,
    return
  }
  func.func @transform_0(%arg0: i32, %arg1: i32) -> (i32, i32, i32) {
    %c0_i32 = arith.constant 0 : i32
    %c0_i32_0 = arith.constant 0 : i32
    return %arg0, %c0_i32, %arg1 : i32, i32, i32
  }
  func.func @transform_1(%arg0: i32, %arg1: i32) -> (i32, i32, i32) {
    %c0_i32 = arith.constant 0 : i32
    %c0_i32_0 = arith.constant 0 : i32
    return %arg0, %c0_i32, %arg1 : i32, i32, i32
  }
}

</mosaic_0001>

<llo_original>
// kernel: tpu_custom_call.1
$region0: #{tpu_custom_call.1}
  #allocation0 [shape = 'u32[]', space=smem, size = 0x4, offset = 0x4, fixed_abs, tag = 'smem constant byte address 0x4 - core index']
  #allocation1 [shape = 'u32[72,128]{1,0:T(1,128)}', space=vmem, size = 0x9000, scoped, tag = 'internal scratch']
  %s0 = inlined_call_operand.hbm [shape: f32[2,4,256], index: 0, kind: input, shape index: {}]
  %s1 = inlined_call_operand.hbm [shape: f32[2,4,256], index: 1, kind: output, shape index: {}]
  %s2 = sld [smem:[#allocation0]]
  $region41: #{tpu_custom_call.1} parent=0
    _
  %s4 = ssub.s32 1, %s2
  %s5 = scalar_select 0, %s4, %s2
  $region1: #{tpu_custom_call.1} parent=0
    #allocation2 [shape = 'u8[8192]{0}', space=vmem, size = 0x2000, scoped, tag = 'input window, operand 0']
    #allocation3 [shape = 's32[2]{0}', space=sflag, size = 0x8, scoped, tag = 'scoped memory for tpu_custom_call.1']
    #allocation4 [shape = 's32[2]{0}', space=sflag, size = 0x8, scoped, tag = 'scoped memory for tpu_custom_call.1']
    #allocation5 [shape = 'u8[8192]{0}', space=vmem, size = 0x2000, scoped, tag = 'output window, operand 0']
    %6 = vsyncpa [#allocation3], 0
    %s7 = scalar_lea.sflag [#allocation3], 1
    %8 = vsyncpa %s7, 0
    %9 = vsyncpa [#allocation4], 0
    %s10 = scalar_lea.sflag [#allocation4], 1
    %11 = vsyncpa %s10, 0
    loop: start=0, step=1, limit=4
    $region2: #{tpu_custom_call.1} parent=1 // loop_pre_header
      _
    $region3: #{tpu_custom_call.1} parent=1 // loop_header
      %s13 = sphi 0, %s17
      %p14 = scmp.ge.s32.totalorder %s13, 4
      %s20 = sphi 0, %s32
      %s21 = sphi 0, %s28
      %s22 = sphi 0, %s20
      %s23 = sphi 0, %s21
      %s24 = sphi 0, %s22
      %s25 = sphi 0, %s23
      %s37 = sphi 0, %s39
      %s40 = sphi 0, %s37
      %s41 = sphi 0, %s40
      %s57 = sphi 0, %s41
      %s65 = sphi 0, %s67
      %s68 = sphi 0, %s65
      %s69 = sphi 0, %s68
      %s85 = sphi 0, %s69
    $region4: #{tpu_custom_call.1} parent=1 // loop_header_branch
      %16 = sbr.rel (%p14) target = $region8
    $region5: #{tpu_custom_call.1} parent=1 // loop_body
      %s18 = ssub.s32 %s13, 1
      %s19 = ssub.s32 %s13, 2
      %s26 = sadd.s32 1, %s21
      %p27 = scmp.ge.s32.totalorder %s26, 1
      %s28 = scalar_select %p27, 0, %s26
      %s29 = sadd.s32 1, %s20
      %s30 = scalar_select %p27, %s29, %s20
      %p31 = scmp.ge.s32.totalorder %s30, 2
      %s32 = scalar_select %p31, 0, %s30
      %s33 = ssub.s32 %s20, %s32
      %s34 = ssub.s32 %s21, %s28
      %s35 = sor.u32 %s33, %s34
      %p36 = scmp.eq.s32.totalorder %s35, 0
      %s38 = sadd.s32 %s37, 1
      %s39 = scalar_select %p36, %s37, %s38
      %p42 = pneg %p36
      %p43 = scmp.eq.s32.totalorder %s13, 1
      %p44 = por %p42, %p43
      %p45 = scmp.ne.s32.totalorder %s37, %s40
      %p46 = scmp.eq.s32.totalorder %s13, 0
      %p47 = por %p45, %p46
      %p48 = scmp.ne.s32.totalorder %s37, %s40
      %p49 = scmp.eq.s32.totalorder %s18, 1
      %p50 = por %p48, %p49
      %p51 = scmp.ne.s32.totalorder %s40, %s41
      %p52 = scmp.eq.s32.totalorder %s18, 0
      %p53 = por %p51, %p52
      %p54 = scmp.ne.s32.totalorder %s40, %s41
      %p55 = scmp.eq.s32.totalorder %s19, 1
      %p56 = por %p54, %p55
      %p58 = scmp.ne.s32.totalorder %s41, %s57
      %p59 = scmp.eq.s32.totalorder %s19, 0
      %p60 = por %p58, %p59
      %s61 = ssub.s32 %s20, %s32
      %s62 = ssub.s32 %s21, %s28
      %s63 = sor.u32 %s61, %s62
      %p64 = scmp.eq.s32.totalorder %s63, 0
      %s66 = sadd.s32 %s65, 1
      %s67 = scalar_select %p64, %s65, %s66
      %p70 = pneg %p64
      %p71 = scmp.eq.s32.totalorder %s13, 1
      %p72 = por %p70, %p71
      %p73 = scmp.ne.s32.totalorder %s65, %s68
      %p74 = scmp.eq.s32.totalorder %s13, 0
      %p75 = por %p73, %p74
      %p76 = scmp.ne.s32.totalorder %s65, %s68
      %p77 = scmp.eq.s32.totalorder %s18, 1
      %p78 = por %p76, %p77
      %p79 = scmp.ne.s32.totalorder %s68, %s69
      %p80 = scmp.eq.s32.totalorder %s18, 0
      %p81 = por %p79, %p80
      %p82 = scmp.ne.s32.totalorder %s68, %s69
      %p83 = scmp.eq.s32.totalorder %s19, 1
      %p84 = por %p82, %p83
      %p86 = scmp.ne.s32.totalorder %s69, %s85
      %p87 = scmp.eq.s32.totalorder %s19, 0
      %p88 = por %p86, %p87
      %p89 = scmp.le.s32.totalorder 1, %s13
      %p90 = scmp.lt.s32.totalorder %s13, 3
      %p91 = pnand %p89, %p90
      %p92 = pneg %p91
      // Predicated region
      $region9: #{tpu_custom_call.1} parent=5 // pred_check
        _
      $region10: #{tpu_custom_call.1} parent=5 // pred_check_branch
        %94 = sbr.rel (%p91) target = $region12
      $region11: #{tpu_custom_call.1} parent=5 // pred_region
        %s95 = ssub.s32 %s13, 1
      $region12: #{tpu_custom_call.1} parent=5 // pred_fallthru
        _
      %p96 = scmp.lt.s32.totalorder %s13, 2
      // Predicated region
      $region13: #{tpu_custom_call.1} parent=5 // pred_check
        %p97 = pneg %p96
      $region14: #{tpu_custom_call.1} parent=5 // pred_check_branch
        %99 = sbr.rel (%p97) target = $region16
      $region15: #{tpu_custom_call.1} parent=5 // pred_region
        // Predicated region
        $region17: #{tpu_custom_call.1} parent=15 // pred_check
          %p100 = pneg %p47
        $region18: #{tpu_custom_call.1} parent=15 // pred_check_branch
          %102 = sbr.rel (%p100) target = $region20
        $region19: #{tpu_custom_call.1} parent=15 // pred_region
          %s103 = sand.u32 %s37, 1
          %s104 = scalar_lea.sflag [#allocation3], %s103
          %s105 = sand.u32 %s37, 1
          %s106 = smul.addr %s105, 8
          %s107 = scalar_lea.vmem [#allocation2], %s106
          %s108 = smul.u32 2, %s21
          %110 = vsyncadd %s104, 0
          %s111 = smul.addr %s20, 2
          %s112 = sadd.s32 %s108, %s111
          %s113 = smul.addr %s112, 4
          %s114 = scalar_lea.hbm %s0, %s113
          %s116 = sshll.u32 %s114, 4
          %s117 = int_to_ptr.hbm [resolvable:$true] %s116
          %s118 = sshll.u32 %s107, 4
          %s119 = int_to_ptr.vmem [resolvable:$true] %s118
          %121 = dma.hbm_to_vmem [thread:$0]  %s117, 128, %s119, %s104
        $region20: #{tpu_custom_call.1} parent=15 // pred_fallthru
          _
      $region16: #{tpu_custom_call.1} parent=5 // pred_fallthru
        _
      %p122 = scmp.le.s32.totalorder 1, %s13
      %p123 = scmp.lt.s32.totalorder %s13, 3
      %p124 = pnand %p122, %p123
      %p125 = pneg %p124
      // Predicated region
      $region21: #{tpu_custom_call.1} parent=5 // pred_check
        _
      $region22: #{tpu_custom_call.1} parent=5 // pred_check_branch
        %127 = sbr.rel (%p124) target = $region24
      $region23: #{tpu_custom_call.1} parent=5 // pred_region
        %s128 = ssub.s32 %s13, 1
        %s129 = sand.u32 %s40, 1
        %s130 = scalar_lea.sflag [#allocation3], %s129
        %s131 = sand.u32 %s40, 1
        %s132 = smul.addr %s131, 8
        %s133 = scalar_lea.vmem [#allocation2], %s132
        // Predicated region
        $region25: #{tpu_custom_call.1} parent=23 // pred_check
          %p134 = pneg %p53
        $region26: #{tpu_custom_call.1} parent=23 // pred_check_branch
          %136 = sbr.rel (%p134) target = $region28
        $region27: #{tpu_custom_call.1} parent=23 // pred_region
          %138 = dma.done %s130, 128
        $region28: #{tpu_custom_call.1} parent=23 // pred_fallthru
          _
        %s139 = sand.u32 %s40, 1
        %s140 = scalar_lea.sflag [#allocation3], %s139
        %s141 = sand.u32 %s40, 1
        %s142 = smul.addr %s141, 8
        %s143 = scalar_lea.vmem [#allocation2], %s142
        %p144 = pneg %p53
        %p145 = pneg %p50
        %p146 = pneg %p81
        %p147 = pneg %p78
        %s148 = sand.u32 %s68, 1
        %s149 = scalar_lea.sflag [#allocation4], %s148
        %s150 = sand.u32 %s68, 1
        %s151 = smul.addr %s150, 8
        %s152 = scalar_lea.vmem [#allocation5], %s151
        %s153 = smul.u32 2, %s23
        %s154 = smul.u32 2, %s23
        %v155 = vld [vmem:[%s133] sm:$0xff]
        %157 = vst [vmem:[#allocation1] ss:$2 sm:$0xff] %v155
        %v158 = vld.sshfl [vmem:[#allocation1] sm:$0xff pattern:$0x75316420]
        %v159 = vld.sshfl [vmem:[#allocation1 + $0x8] sm:$0xff pattern:$0x75316420]
        %vm162 = vcmask 1043456
        %v163 = vsel %vm162, %v158, 0.0
        %v164 = vrot.slane %v163, 4
        %v165 = vadd.f32 %v163, %v164
        %v166 = vrot.slane %v165, 2
        %v167 = vadd.f32 %v165, %v166
        %v168 = vrot.slane %v167, 1
        %v169 = vadd.f32 %v167, %v168
        %v170 = vsel %vm162, %v159, 0.0
        %v171 = vrot.slane %v170, 4
        %v172 = vadd.f32 %v170, %v171
        %v173 = vrot.slane %v172, 2
        %v174 = vadd.f32 %v172, %v173
        %v175 = vrot.slane %v174, 1
        %v176 = vadd.f32 %v174, %v175
        %v177 = vmul.f32 %v169, 0.25
        %v178 = vmul.f32 %v176, 0.25
        %vm179 = vcmp.gt.f32.partialorder %v177, 0.8
        %vm180 = vcmp.gt.f32.partialorder %v178, 0.8
        %v181 = vsel %vm179, 0.0, 1.0
        %v182 = vsel %vm180, 0.0, 1.0
        %v183 = vxor.u32 %v177, 2147483648
        %v184 = vxor.u32 %v178, 2147483648
        %v185 = vmul.f32 %v183, 1.442695
        %v186 = vpow.pop %v185
        %v187 = vmul.f32 %v184, 1.442695
        %v188 = vpow.pop %v187
        %v189 = vadd.f32 %v186, 1.0
        %v190 = vadd.f32 %v188, 1.0
        %v191 = vrcp.pop %v189
        %v192 = vmul.f32 %v189, %v191
        %v193 = vsub.f32 1.0, %v192
        %v194 = vmul.f32 %v191, %v193
        %v195 = vadd.f32 %v191, %v194
        %vm196 = vweird.f32 %v189
        %vm197 = vweird.f32 %v191
        %vm198 = vmor %vm196, %vm197
        %v199 = vsel %vm198, %v191, %v195
        %v200 = vand.u32 2147483647, %v189
        %vm201 = vcmp.eq.f32.partialorder %v200, 8.507059e+37
        %v202 = vand.u32 %v189, 2147483648
        %v203 = vor.u32 1.1754944e-38, %v202
        %v204 = vsel %vm201, %v203, %v199
        %v205 = vmul.f32 1.0, %v204
        %v206 = vrcp.pop %v190
        %v207 = vmul.f32 %v190, %v206
        %v208 = vsub.f32 1.0, %v207
        %v209 = vmul.f32 %v206, %v208
        %v210 = vadd.f32 %v206, %v209
        %vm211 = vweird.f32 %v190
        %vm212 = vweird.f32 %v206
        %vm213 = vmor %vm211, %vm212
        %v214 = vsel %vm213, %v206, %v210
        %v215 = vand.u32 2147483647, %v190
        %vm216 = vcmp.eq.f32.partialorder %v215, 8.507059e+37
        %v217 = vand.u32 %v190, 2147483648
        %v218 = vor.u32 1.1754944e-38, %v217
        %v219 = vsel %vm216, %v218, %v214
        %v220 = vmul.f32 1.0, %v219
        %v221 = vmul.f32 %v205, 0.19270617
        %v222 = vmul.f32 %v220, 0.19270617
        %v223 = vmul.f32 %v181, 0.80729383
        %v224 = vmul.f32 %v182, 0.80729383
        %v225 = vadd.f32 %v221, %v223
        %v226 = vadd.f32 %v222, %v224
        %v229 = vrot.slane %v226, 4
        %v230 = vsel %vm162, %v225, %v229
        %v232 = vmul.f32 %v155, %v230
        %233 = vst [vmem:[%s152] sm:$0xff] %v232
        %s234 = sand.u32 %s68, 1
        %s235 = scalar_lea.sflag [#allocation4], %s234
        %s236 = sand.u32 %s68, 1
        %s237 = smul.addr %s236, 8
        %s238 = scalar_lea.vmem [#allocation5], %s237
        // Predicated region
        $region29: #{tpu_custom_call.1} parent=23 // pred_check
          %p239 = pneg %p78
        $region30: #{tpu_custom_call.1} parent=23 // pred_check_branch
          %241 = sbr.rel (%p239) target = $region32
        $region31: #{tpu_custom_call.1} parent=23 // pred_region
          %s242 = smul.u32 2, %s23
          %244 = vsyncadd %s235, 0
          %s245 = smul.addr %s22, 2
          %s246 = sadd.s32 %s242, %s245
          %s247 = smul.addr %s246, 4
          %s248 = scalar_lea.hbm %s1, %s247
          %s250 = sshll.u32 %s238, 4
          %s251 = int_to_ptr.vmem [resolvable:$true] %s250
          %s252 = sshll.u32 %s248, 4
          %s253 = int_to_ptr.hbm [resolvable:$true] %s252
          %255 = dma.vmem_to_hbm [thread:$0]  %s251, 128, %s253, %s235
        $region32: #{tpu_custom_call.1} parent=23 // pred_fallthru
          _
      $region24: #{tpu_custom_call.1} parent=5 // pred_fallthru
        _
      %p256 = scmp.le.s32.totalorder 2, %s13
      // Predicated region
      $region33: #{tpu_custom_call.1} parent=5 // pred_check
        %p257 = pneg %p256
      $region34: #{tpu_custom_call.1} parent=5 // pred_check_branch
        %259 = sbr.rel (%p257) target = $region36
      $region35: #{tpu_custom_call.1} parent=5 // pred_region
        %s260 = ssub.s32 %s13, 2
        // Predicated region
        $region37: #{tpu_custom_call.1} parent=35 // pred_check
          %p261 = pneg %p84
        $region38: #{tpu_custom_call.1} parent=35 // pred_check_branch
          %263 = sbr.rel (%p261) target = $region40
        $region39: #{tpu_custom_call.1} parent=35 // pred_region
          %s264 = sand.u32 %s69, 1
          %s265 = scalar_lea.sflag [#allocation4], %s264
          %s266 = sand.u32 %s69, 1
          %s267 = smul.addr %s266, 8
          %s268 = scalar_lea.vmem [#allocation5], %s267
          %270 = dma.done %s265, 128
        $region40: #{tpu_custom_call.1} parent=35 // pred_fallthru
          _
      $region36: #{tpu_custom_call.1} parent=5 // pred_fallthru
        _
    $region6: #{tpu_custom_call.1} parent=1 // loop_footer
      %s17 = sadd.s32 1, %s13
    $region7: #{tpu_custom_call.1} parent=1 // loop_footer_branch
      %12 = sbr.rel target = $region3
    $region8: #{tpu_custom_call.1} parent=1 // loop_exit
      _
    %271 = vsyncpa [#allocation3], 1
    %s272 = scalar_lea.sflag [#allocation3], 1
    %273 = vsyncpa %s272, 1
    %274 = vsyncpa [#allocation4], 1
    %s275 = scalar_lea.sflag [#allocation4], 1
    %276 = vsyncpa %s275, 1

</llo_original>
